<compile_context>
chip_gen: v7x
topology: tpu7x:2x2x1
jax: 0.10.0
libtpu: 0.0.40
codegen_flags: <defaults>
</compile_context>

<pallas_src>
import jax
import jax.numpy as jnp
from jax.experimental import pallas as pl
from jax.experimental.pallas import tpu as pltpu

N_FEATURES = 32       # n_features of the encoder output
PROJECTION_DIM = 16   # projection_dim of the projector


# ------------------------- fused SimCLR forward kernel ----------------------
def _simclr_kernel(x_ref, wenc_ref, w1_ref, w2p_ref, out_ref):
    # x_ref:    (TILE_B, C, HW)       batch tile, HW on the lane axis
    # wenc_ref: (C, F, 1)             pointwise-conv weight, 1/HW folded in,
    #                                 arranged so w[c] is an (F, 1) sublane column
    # w1_ref:   (F, F)                projector layer 1, stored (in, out)
    # w2p_ref:  (F, OUT_W - F)        projector layer 2, zero-padded on the lane axis
    # out_ref:  (TILE_B, OUT_W)       packed: cols [0,F) = h, cols [F,F+P) = z
    tile_b, c_dim, hw = x_ref.shape
    f = w1_ref.shape[0]

    # ---- encoder: pointwise conv as C (=4) unrolled VPU broadcast-FMAs --------
    # feat[n, f, s] = sum_c w[f, c] * x[n, c, s]    (accumulated in f32 vregs)
    acc = wenc_ref[0] * x_ref[:, 0, :][:, None, :]            # (TILE_B, F, HW)
    for c in range(1, c_dim):                                 # static unroll, C small
        acc = acc + wenc_ref[c] * x_ref[:, c, :][:, None, :]

    feat = jnp.maximum(acc, 0.0)                              # ReLU
    h = jnp.sum(feat, axis=-1)                                # (TILE_B, F); mean via folded 1/HW

    # ---- projector: Linear -> ReLU -> Linear (no biases), MXU ------------------
    t = jnp.maximum(
        jnp.dot(h, w1_ref[...], preferred_element_type=jnp.float32), 0.0)
    z_pad = jnp.dot(t, w2p_ref[...], preferred_element_type=jnp.float32)  # (TILE_B, OUT_W-F)

    # ---- single lane-dense packed store (no per-step zeros) --------------------
    out_ref[...] = jnp.concatenate([h, z_pad], axis=-1)


def _pick_tile_b(b2):
    """Largest MXU-friendly tile that divides the 2N batch; fall back to one tile."""
    for t in (256, 128, 64, 32, 16, 8):
        if b2 % t == 0:
            return t
    return b2  # tiny / ragged batch: single block (block dim == full dim, layout-legal)


def simclr_forward(params, x_i, x_j):
    n, c, hh, ww = x_i.shape
    hw = hh * ww
    b2 = 2 * n
    f = params["w1"].shape[0]
    p = params["w2"].shape[1]

    # Both views in one launch; NCHW -> (B2, C, HW) is a free reshape (no transpose).
    x_all = jnp.concatenate([x_i, x_j], axis=0).reshape(b2, c, hw).astype(jnp.float32)

    # Fold the global-average-pool scale 1/(H*W) into the conv weight (ReLU is
    # positive-homogeneous).  Arrange as (C, F, 1) so w[c] broadcasts along lanes.
    wenc_k = (params["w_enc"].astype(jnp.float32) / hw)[:, :, None]       # (C, F, 1)

    # Lane-dense packed output slab; fold the pad columns into w2 at trace time.
    out_w = max(128, pl.cdiv(f + p, 128) * 128)
    w2p = jnp.concatenate(
        [params["w2"].astype(jnp.float32),
         jnp.zeros((f, out_w - f - p), jnp.float32)], axis=1)             # (F, OUT_W-F)

    tile_b = _pick_tile_b(b2)
    grid = (b2 // tile_b,)

    packed = pl.pallas_call(
        _simclr_kernel,
        out_shape=jax.ShapeDtypeStruct((b2, out_w), jnp.float32),
        grid_spec=pltpu.PrefetchScalarGridSpec(
            num_scalar_prefetch=0,
            grid=grid,
            in_specs=[
                pl.BlockSpec((tile_b, c, hw), lambda i: (i, 0, 0)),       # batch tile
                pl.BlockSpec((c, f, 1), lambda i: (0, 0, 0)),             # resident weights
                pl.BlockSpec((f, f), lambda i: (0, 0)),
                pl.BlockSpec((f, out_w - f), lambda i: (0, 0)),
            ],
            out_specs=pl.BlockSpec((tile_b, out_w), lambda i: (i, 0)),
        ),
        compiler_params=pltpu.CompilerParams(
            dimension_semantics=("parallel",)),                           # 2 TCs on v7x
    )(x_all, wenc_k, params["w1"].astype(jnp.float32), w2p)

    h_all = packed[:, :f]
    z_all = packed[:, f:f + p]
    return h_all[:n], h_all[n:], z_all[:n], z_all[n:]


def init_params(key, in_channels):
    k0, k1, k2 = jax.random.split(key, 3)
    # weights stored as (in, out); equivalent to PyTorch's (out, in) transposed
    w_enc = jax.random.normal(k0, (in_channels, N_FEATURES), jnp.float32) * 0.1
    w1 = jax.random.normal(k1, (N_FEATURES, N_FEATURES), jnp.float32) * 0.1
    w2 = jax.random.normal(k2, (N_FEATURES, PROJECTION_DIM), jnp.float32) * 0.1
    return {"w_enc": w_enc, "w1": w1, "w2": w2}


if __name__ == "__main__":
    key = jax.random.PRNGKey(0)
    kp, ki, kj = jax.random.split(key, 3)

    batch, channels, spatial = 2, 4, 16
    params = init_params(kp, channels)
    x_i = jax.random.normal(ki, (batch, channels, spatial, spatial), jnp.float32)
    x_j = jax.random.normal(kj, (batch, channels, spatial, spatial), jnp.float32)

    fwd = jax.jit(simclr_forward)
    h_i, h_j, z_i, z_j = jax.block_until_ready(fwd(params, x_i, x_j))

    assert h_i.shape == (batch, N_FEATURES)
    assert h_j.shape == (batch, N_FEATURES)
    assert z_i.shape == (batch, PROJECTION_DIM)
    assert z_j.shape == (batch, PROJECTION_DIM)

    # reference check in plain JAX
    def ref_enc(x):
        xr = jnp.transpose(x, (0, 2, 3, 1)).reshape(x.shape[0], -1, x.shape[1])
        return jnp.mean(jnp.maximum(xr @ params["w_enc"], 0.0), axis=1)

    def ref_proj(h):
        return jnp.maximum(h @ params["w1"], 0.0) @ params["w2"]

    assert jnp.allclose(h_i, ref_enc(x_i), atol=1e-5)
    assert jnp.allclose(h_j, ref_enc(x_j), atol=1e-5)
    assert jnp.allclose(z_i, ref_proj(ref_enc(x_i)), atol=1e-5)
    assert jnp.allclose(z_j, ref_proj(ref_enc(x_j)), atol=1e-5)

    print("KERNEL_OK")
</pallas_src>

<mosaic_0001>
module attributes {stable_mosaic.version = 11 : i64} {
  func.func @_simclr_kernel(%arg0: i32, %arg1: memref<4x4x256xf32, #tpu.memory_space<vmem>>, %arg2: memref<4x32x1xf32, #tpu.memory_space<vmem>>, %arg3: memref<32x32xf32, #tpu.memory_space<vmem>>, %arg4: memref<32x96xf32, #tpu.memory_space<vmem>>, %arg5: memref<4x128xf32, #tpu.memory_space<vmem>>) attributes {dimension_semantics = [#tpu.dimension_semantics<parallel>], iteration_bounds = array<i64: 1>, scalar_prefetch = 0 : i64, scratch_operands = 0 : i64, tpu.core_type = #tpu.core_type<tc>, window_params = [{transform_indices = @transform_0, window_bounds = array<i64: 4, 4, 256>}, {pipeline_mode = #tpu.pipeline_mode<synchronous>, transform_indices = @transform_1, window_bounds = array<i64: 4, 32, 1>}, {pipeline_mode = #tpu.pipeline_mode<synchronous>, transform_indices = @transform_2, window_bounds = array<i64: 32, 32>}, {pipeline_mode = #tpu.pipeline_mode<synchronous>, transform_indices = @transform_3, window_bounds = array<i64: 32, 96>}, {transform_indices = @transform_4, window_bounds = array<i64: 4, 128>}]} {
    %c0 = arith.constant 0 : index
    %c0_0 = arith.constant 0 : index
    %c0_1 = arith.constant 0 : index
    %0 = vector.load %arg2[%c0, %c0_0, %c0_1] : memref<4x32x1xf32, #tpu.memory_space<vmem>>, vector<1x32x1xf32>
    %1 = vector.shape_cast %0 : vector<1x32x1xf32> to vector<32x1xf32>
    %c0_2 = arith.constant 0 : index
    %c0_3 = arith.constant 0 : index
    %c0_4 = arith.constant 0 : index
    %2 = vector.load %arg1[%c0_2, %c0_3, %c0_4] : memref<4x4x256xf32, #tpu.memory_space<vmem>>, vector<4x1x256xf32>
    %3 = vector.shape_cast %2 : vector<4x1x256xf32> to vector<4x256xf32>
    %4 = vector.shape_cast %3 : vector<4x256xf32> to vector<4x1x256xf32>
    %5 = vector.shape_cast %1 : vector<32x1xf32> to vector<1x32x1xf32>
    %6 = vector.broadcast %5 : vector<1x32x1xf32> to vector<4x32x256xf32>
    %7 = vector.broadcast %4 : vector<4x1x256xf32> to vector<4x32x256xf32>
    %8 = arith.mulf %6, %7 : vector<4x32x256xf32>
    %c1 = arith.constant 1 : index
    %c0_5 = arith.constant 0 : index
    %c0_6 = arith.constant 0 : index
    %9 = vector.load %arg2[%c1, %c0_5, %c0_6] : memref<4x32x1xf32, #tpu.memory_space<vmem>>, vector<1x32x1xf32>
    %10 = vector.shape_cast %9 : vector<1x32x1xf32> to vector<32x1xf32>
    %c0_7 = arith.constant 0 : index
    %c1_8 = arith.constant 1 : index
    %c0_9 = arith.constant 0 : index
    %11 = vector.load %arg1[%c0_7, %c1_8, %c0_9] : memref<4x4x256xf32, #tpu.memory_space<vmem>>, vector<4x1x256xf32>
    %12 = vector.shape_cast %11 : vector<4x1x256xf32> to vector<4x256xf32>
    %13 = vector.shape_cast %12 : vector<4x256xf32> to vector<4x1x256xf32>
    %14 = vector.shape_cast %10 : vector<32x1xf32> to vector<1x32x1xf32>
    %15 = vector.broadcast %14 : vector<1x32x1xf32> to vector<4x32x256xf32>
    %16 = vector.broadcast %13 : vector<4x1x256xf32> to vector<4x32x256xf32>
    %17 = arith.mulf %15, %16 : vector<4x32x256xf32>
    %18 = arith.addf %8, %17 : vector<4x32x256xf32>
    %c2 = arith.constant 2 : index
    %c0_10 = arith.constant 0 : index
    %c0_11 = arith.constant 0 : index
    %19 = vector.load %arg2[%c2, %c0_10, %c0_11] : memref<4x32x1xf32, #tpu.memory_space<vmem>>, vector<1x32x1xf32>
    %20 = vector.shape_cast %19 : vector<1x32x1xf32> to vector<32x1xf32>
    %c0_12 = arith.constant 0 : index
    %c2_13 = arith.constant 2 : index
    %c0_14 = arith.constant 0 : index
    %21 = vector.load %arg1[%c0_12, %c2_13, %c0_14] : memref<4x4x256xf32, #tpu.memory_space<vmem>>, vector<4x1x256xf32>
    %22 = vector.shape_cast %21 : vector<4x1x256xf32> to vector<4x256xf32>
    %23 = vector.shape_cast %22 : vector<4x256xf32> to vector<4x1x256xf32>
    %24 = vector.shape_cast %20 : vector<32x1xf32> to vector<1x32x1xf32>
    %25 = vector.broadcast %24 : vector<1x32x1xf32> to vector<4x32x256xf32>
    %26 = vector.broadcast %23 : vector<4x1x256xf32> to vector<4x32x256xf32>
    %27 = arith.mulf %25, %26 : vector<4x32x256xf32>
    %28 = arith.addf %18, %27 : vector<4x32x256xf32>
    %c3 = arith.constant 3 : index
    %c0_15 = arith.constant 0 : index
    %c0_16 = arith.constant 0 : index
    %29 = vector.load %arg2[%c3, %c0_15, %c0_16] : memref<4x32x1xf32, #tpu.memory_space<vmem>>, vector<1x32x1xf32>
    %30 = vector.shape_cast %29 : vector<1x32x1xf32> to vector<32x1xf32>
    %c0_17 = arith.constant 0 : index
    %c3_18 = arith.constant 3 : index
    %c0_19 = arith.constant 0 : index
    %31 = vector.load %arg1[%c0_17, %c3_18, %c0_19] : memref<4x4x256xf32, #tpu.memory_space<vmem>>, vector<4x1x256xf32>
    %32 = vector.shape_cast %31 : vector<4x1x256xf32> to vector<4x256xf32>
    %33 = vector.shape_cast %32 : vector<4x256xf32> to vector<4x1x256xf32>
    %34 = vector.shape_cast %30 : vector<32x1xf32> to vector<1x32x1xf32>
    %35 = vector.broadcast %34 : vector<1x32x1xf32> to vector<4x32x256xf32>
    %36 = vector.broadcast %33 : vector<4x1x256xf32> to vector<4x32x256xf32>
    %37 = arith.mulf %35, %36 : vector<4x32x256xf32>
    %38 = arith.addf %28, %37 : vector<4x32x256xf32>
    %cst = arith.constant 0.000000e+00 : f32
    %39 = vector.broadcast %cst : f32 to vector<4x32x256xf32>
    %40 = arith.maximumf %38, %39 : vector<4x32x256xf32>
    %cst_20 = arith.constant dense<0.000000e+00> : vector<4x32xf32>
    %41 = vector.multi_reduction <add>, %40, %cst_20 [2] : vector<4x32x256xf32> to vector<4x32xf32>
    %c0_21 = arith.constant 0 : index
    %c0_22 = arith.constant 0 : index
    %42 = vector.load %arg3[%c0_21, %c0_22] : memref<32x32xf32, #tpu.memory_space<vmem>>, vector<32x32xf32>
    %cst_23 = arith.constant dense<0.000000e+00> : vector<4x32xf32>
    %43 = tpu.matmul %41, %42, %cst_23 {dimension_numbers = #tpu.dot_dimension_numbers<[1], [0], [0], [1], [0, 0, 1, 1], [], []>} : vector<4x32xf32>, vector<32x32xf32>, vector<4x32xf32> -> vector<4x32xf32>
    %cst_24 = arith.constant 0.000000e+00 : f32
    %44 = vector.broadcast %cst_24 : f32 to vector<4x32xf32>
    %45 = arith.maximumf %43, %44 : vector<4x32xf32>
    %c0_25 = arith.constant 0 : index
    %c0_26 = arith.constant 0 : index
    %46 = vector.load %arg4[%c0_25, %c0_26] : memref<32x96xf32, #tpu.memory_space<vmem>>, vector<32x96xf32>
    %cst_27 = arith.constant dense<0.000000e+00> : vector<4x96xf32>
    %47 = tpu.matmul %45, %46, %cst_27 {dimension_numbers = #tpu.dot_dimension_numbers<[1], [0], [0], [1], [0, 0, 1, 1], [], []>} : vector<4x32xf32>, vector<32x96xf32>, vector<4x96xf32> -> vector<4x96xf32>
    %48 = tpu.concatenate %41, %47 in 1 : vector<4x32xf32>, vector<4x96xf32> -> vector<4x128xf32>
    %c0_28 = arith.constant 0 : index
    %c0_29 = arith.constant 0 : index
    %49 = vector.load %arg5[%c0_28, %c0_29] : memref<4x128xf32, #tpu.memory_space<vmem>>, vector<4x128xf32>
    tpu.vector_store %arg5[%c0_28, %c0_29], %48 {strides = array<i32>} : memref<4x128xf32, #tpu.memory_space<vmem>>, vector<4x128xf32>,
    return
  }
  func.func @transform_0(%arg0: i32) -> (i32, i32, i32) {
    %c0_i32 = arith.constant 0 : i32
    %c0_i32_0 = arith.constant 0 : i32
    %c0_i32_1 = arith.constant 0 : i32
    return %arg0, %c0_i32, %c0_i32_0 : i32, i32, i32
  }
  func.func @transform_1(%arg0: i32) -> (i32, i32, i32) {
    %c0_i32 = arith.constant 0 : i32
    %c0_i32_0 = arith.constant 0 : i32
    %c0_i32_1 = arith.constant 0 : i32
    %c0_i32_2 = arith.constant 0 : i32
    return %c0_i32, %c0_i32_0, %c0_i32_1 : i32, i32, i32
  }
  func.func @transform_2(%arg0: i32) -> (i32, i32) {
    %c0_i32 = arith.constant 0 : i32
    %c0_i32_0 = arith.constant 0 : i32
    %c0_i32_1 = arith.constant 0 : i32
    return %c0_i32, %c0_i32_0 : i32, i32
  }
  func.func @transform_3(%arg0: i32) -> (i32, i32) {
    %c0_i32 = arith.constant 0 : i32
    %c0_i32_0 = arith.constant 0 : i32
    %c0_i32_1 = arith.constant 0 : i32
    return %c0_i32, %c0_i32_0 : i32, i32
  }
  func.func @transform_4(%arg0: i32) -> (i32, i32) {
    %c0_i32 = arith.constant 0 : i32
    %c0_i32_0 = arith.constant 0 : i32
    return %arg0, %c0_i32 : i32, i32
  }
}

</mosaic_0001>

<llo_original>
// kernel: simclr_forward.1
$region0: #{simclr_forward.1}
  #allocation0 [shape = 'u32[]', space=smem, size = 0x4, offset = 0x4, fixed_abs, tag = 'smem constant byte address 0x4 - core index']
  #allocation1 [shape = 'u32[144,128]{1,0:T(1,128)}', space=vmem, size = 0x12000, scoped, tag = 'internal scratch']
  %s0 = inlined_call_operand.vmem [shape: f32[4,4,256], index: 0, kind: input, shape index: {}]
  %s1 = inlined_call_operand.vmem [shape: f32[4,32,1], index: 1, kind: input, shape index: {}]
  %s2 = inlined_call_operand.vmem [shape: f32[32,32], index: 2, kind: input, shape index: {}]
  %s3 = inlined_call_operand.vmem [shape: f32[32,96], index: 3, kind: input, shape index: {}]
  %s4 = inlined_call_operand.vmem [shape: f32[4,128], index: 4, kind: output, shape index: {}]
  %s5 = sld [smem:[#allocation0]]
  $region26: #{simclr_forward.1} parent=0
    _
  %s7 = ssub.s32 1, %s5
  %s8 = scalar_select 0, %s7, %s5
  // Predicated region
  $region2: #{simclr_forward.1} parent=0 // pred_check
    _
  $region3: #{simclr_forward.1} parent=0 // pred_check_branch
    %10 = sbr.rel (0) target = $region5
  $region4: #{simclr_forward.1} parent=0 // pred_region
    _
  $region5: #{simclr_forward.1} parent=0 // pred_fallthru
    _
  // Predicated region
  $region6: #{simclr_forward.1} parent=0 // pred_check
    _
  $region7: #{simclr_forward.1} parent=0 // pred_check_branch
    %12 = sbr.rel (0) target = $region9
  $region8: #{simclr_forward.1} parent=0 // pred_region
    _
  $region9: #{simclr_forward.1} parent=0 // pred_fallthru
    _
  // Predicated region
  $region10: #{simclr_forward.1} parent=0 // pred_check
    _
  $region11: #{simclr_forward.1} parent=0 // pred_check_branch
    %14 = sbr.rel (0) target = $region13
  $region12: #{simclr_forward.1} parent=0 // pred_region
    _
  $region13: #{simclr_forward.1} parent=0 // pred_fallthru
    _
  // Predicated region
  $region14: #{simclr_forward.1} parent=0 // pred_check
    _
  $region15: #{simclr_forward.1} parent=0 // pred_check_branch
    %16 = sbr.rel (0) target = $region17
  $region16: #{simclr_forward.1} parent=0 // pred_region
    _
  $region17: #{simclr_forward.1} parent=0 // pred_fallthru
    _
  %v17 = vld [vmem:[%s1] sm:$0xff]
  %v18 = vld [vmem:[%s1 + $0x8] sm:$0xff]
  %v19 = vld [vmem:[%s1 + $0x10] sm:$0xff]
  %v20 = vld [vmem:[%s1 + $0x18] sm:$0xff]
  %v21 = vld [vmem:[%s0] ss:$4 sm:$0x3]
  %s22 = scalar_lea.vmem %s0, 8
  %v23 = vld [vmem:[%s22] ss:$4 sm:$0x3]
  %s24 = scalar_lea.vmem %s0, 16
  %v25 = vld [vmem:[%s24] ss:$4 sm:$0x3]
  %s26 = scalar_lea.vmem %s0, 24
  %v27 = vld [vmem:[%s26] ss:$4 sm:$0x3]
  %29 = vset.pattern.permute.xlu0 0
  %30 = vperm.xlu0 %29, %v17
  %v31 = vpop.permute.xlu0 %30
  %34 = vset.pattern.permute.xlu0 0
  %35 = vperm.xlu0 %34, %v18
  %v36 = vpop.permute.xlu0 %35
  %39 = vset.pattern.permute.xlu0 0
  %40 = vperm.xlu0 %39, %v19
  %v41 = vpop.permute.xlu0 %40
  %44 = vset.pattern.permute.xlu0 0
  %45 = vperm.xlu0 %44, %v20
  %v46 = vpop.permute.xlu0 %45
  %v52 = vlaneseq
  %v53 = vshrl.u32 %v52, 7
  %v54 = vsub.s32 0, %v53
  %v55 = vrot.slane %v21, %v54
  %v56 = vlaneseq
  %v57 = vshrl.u32 %v56, 7
  %v58 = vsub.s32 1, %v57
  %v59 = vrot.slane %v21, %v58
  %v60 = vlaneseq
  %v61 = vshrl.u32 %v60, 7
  %v62 = vsub.s32 0, %v61
  %v63 = vrot.slane %v23, %v62
  %v64 = vlaneseq
  %v65 = vshrl.u32 %v64, 7
  %v66 = vsub.s32 1, %v65
  %v67 = vrot.slane %v23, %v66
  %v68 = vlaneseq
  %v69 = vshrl.u32 %v68, 7
  %v70 = vsub.s32 0, %v69
  %v71 = vrot.slane %v25, %v70
  %v72 = vlaneseq
  %v73 = vshrl.u32 %v72, 7
  %v74 = vsub.s32 1, %v73
  %v75 = vrot.slane %v25, %v74
  %v76 = vlaneseq
  %v77 = vshrl.u32 %v76, 7
  %v78 = vsub.s32 0, %v77
  %v79 = vrot.slane %v27, %v78
  %v80 = vlaneseq
  %v81 = vshrl.u32 %v80, 7
  %v82 = vsub.s32 1, %v81
  %v83 = vrot.slane %v27, %v82
  %v92 = vmul.f32 %v31, %v55
  %v93 = vmul.f32 %v31, %v59
  %v94 = vmul.f32 %v36, %v55
  %v95 = vmul.f32 %v36, %v59
  %v96 = vmul.f32 %v41, %v55
  %v97 = vmul.f32 %v41, %v59
  %v98 = vmul.f32 %v46, %v55
  %v99 = vmul.f32 %v46, %v59
  %v100 = vmul.f32 %v31, %v63
  %v101 = vmul.f32 %v31, %v67
  %v102 = vmul.f32 %v36, %v63
  %v103 = vmul.f32 %v36, %v67
  %v104 = vmul.f32 %v41, %v63
  %v105 = vmul.f32 %v41, %v67
  %v106 = vmul.f32 %v46, %v63
  %v107 = vmul.f32 %v46, %v67
  %v108 = vmul.f32 %v31, %v71
  %v109 = vmul.f32 %v31, %v75
  %v110 = vmul.f32 %v36, %v71
  %v111 = vmul.f32 %v36, %v75
  %v112 = vmul.f32 %v41, %v71
  %v113 = vmul.f32 %v41, %v75
  %v114 = vmul.f32 %v46, %v71
  %v115 = vmul.f32 %v46, %v75
  %v116 = vmul.f32 %v31, %v79
  %v117 = vmul.f32 %v31, %v83
  %v118 = vmul.f32 %v36, %v79
  %v119 = vmul.f32 %v36, %v83
  %v120 = vmul.f32 %v41, %v79
  %v121 = vmul.f32 %v41, %v83
  %v122 = vmul.f32 %v46, %v79
  %v123 = vmul.f32 %v46, %v83
  %s124 = scalar_lea.vmem %s1, 32
  %v125 = vld [vmem:[%s124] sm:$0xff]
  %v126 = vld [vmem:[%s124 + $0x8] sm:$0xff]
  %v127 = vld [vmem:[%s124 + $0x10] sm:$0xff]
  %v128 = vld [vmem:[%s124 + $0x18] sm:$0xff]
  %s129 = scalar_lea.vmem %s0, 1
  %v130 = vld [vmem:[%s129] ss:$4 sm:$0x3]
  %s131 = scalar_lea.vmem %s0, 9
  %v132 = vld [vmem:[%s131] ss:$4 sm:$0x3]
  %s133 = scalar_lea.vmem %s0, 17
  %v134 = vld [vmem:[%s133] ss:$4 sm:$0x3]
  %s135 = scalar_lea.vmem %s0, 25
  %v136 = vld [vmem:[%s135] ss:$4 sm:$0x3]
  %138 = vset.pattern.permute.xlu0 0
  %139 = vperm.xlu0 %138, %v125
  %v140 = vpop.permute.xlu0 %139
  %143 = vset.pattern.permute.xlu0 0
  %144 = vperm.xlu0 %143, %v126
  %v145 = vpop.permute.xlu0 %144
  %148 = vset.pattern.permute.xlu0 0
  %149 = vperm.xlu0 %148, %v127
  %v150 = vpop.permute.xlu0 %149
  %153 = vset.pattern.permute.xlu0 0
  %154 = vperm.xlu0 %153, %v128
  %v155 = vpop.permute.xlu0 %154
  %v161 = vlaneseq
  %v162 = vshrl.u32 %v161, 7
  %v163 = vsub.s32 0, %v162
  %v164 = vrot.slane %v130, %v163
  %v165 = vlaneseq
  %v166 = vshrl.u32 %v165, 7
  %v167 = vsub.s32 1, %v166
  %v168 = vrot.slane %v130, %v167
  %v169 = vlaneseq
  %v170 = vshrl.u32 %v169, 7
  %v171 = vsub.s32 0, %v170
  %v172 = vrot.slane %v132, %v171
  %v173 = vlaneseq
  %v174 = vshrl.u32 %v173, 7
  %v175 = vsub.s32 1, %v174
  %v176 = vrot.slane %v132, %v175
  %v177 = vlaneseq
  %v178 = vshrl.u32 %v177, 7
  %v179 = vsub.s32 0, %v178
  %v180 = vrot.slane %v134, %v179
  %v181 = vlaneseq
  %v182 = vshrl.u32 %v181, 7
  %v183 = vsub.s32 1, %v182
  %v184 = vrot.slane %v134, %v183
  %v185 = vlaneseq
  %v186 = vshrl.u32 %v185, 7
  %v187 = vsub.s32 0, %v186
  %v188 = vrot.slane %v136, %v187
  %v189 = vlaneseq
  %v190 = vshrl.u32 %v189, 7
  %v191 = vsub.s32 1, %v190
  %v192 = vrot.slane %v136, %v191
  %v201 = vmul.f32 %v140, %v164
  %v202 = vmul.f32 %v140, %v168
  %v203 = vmul.f32 %v145, %v164
  %v204 = vmul.f32 %v145, %v168
  %v205 = vmul.f32 %v150, %v164
  %v206 = vmul.f32 %v150, %v168
  %v207 = vmul.f32 %v155, %v164
  %v208 = vmul.f32 %v155, %v168
  %v209 = vmul.f32 %v140, %v172
  %v210 = vmul.f32 %v140, %v176
  %v211 = vmul.f32 %v145, %v172
  %v212 = vmul.f32 %v145, %v176
  %v213 = vmul.f32 %v150, %v172
  %v214 = vmul.f32 %v150, %v176
  %v215 = vmul.f32 %v155, %v172
  %v216 = vmul.f32 %v155, %v176
  %v217 = vmul.f32 %v140, %v180
  %v218 = vmul.f32 %v140, %v184
  %v219 = vmul.f32 %v145, %v180
  %v220 = vmul.f32 %v145, %v184
  %v221 = vmul.f32 %v150, %v180
  %v222 = vmul.f32 %v150, %v184
  %v223 = vmul.f32 %v155, %v180
  %v224 = vmul.f32 %v155, %v184
  %v225 = vmul.f32 %v140, %v188
  %v226 = vmul.f32 %v140, %v192
  %v227 = vmul.f32 %v145, %v188
  %v228 = vmul.f32 %v145, %v192
  %v229 = vmul.f32 %v150, %v188
  %v230 = vmul.f32 %v150, %v192
  %v231 = vmul.f32 %v155, %v188
  %v232 = vmul.f32 %v155, %v192
  %v233 = vadd.f32 %v92, %v201
  %v234 = vadd.f32 %v93, %v202
  %v235 = vadd.f32 %v94, %v203
  %v236 = vadd.f32 %v95, %v204
  %v237 = vadd.f32 %v96, %v205
  %v238 = vadd.f32 %v97, %v206
  %v239 = vadd.f32 %v98, %v207
  %v240 = vadd.f32 %v99, %v208
  %v241 = vadd.f32 %v100, %v209
  %v242 = vadd.f32 %v101, %v210
  %v243 = vadd.f32 %v102, %v211
  %v244 = vadd.f32 %v103, %v212
  %v245 = vadd.f32 %v104, %v213
  %v246 = vadd.f32 %v105, %v214
  %v247 = vadd.f32 %v106, %v215
  %v248 = vadd.f32 %v107, %v216
  %v249 = vadd.f32 %v108, %v217
  %v250 = vadd.f32 %v109, %v218
  %v251 = vadd.f32 %v110, %v219
  %v252 = vadd.f32 %v111, %v220
  %v253 = vadd.f32 %v112, %v221
  %v254 = vadd.f32 %v113, %v222
  %v255 = vadd.f32 %v114, %v223
  %v256 = vadd.f32 %v115, %v224
  %v257 = vadd.f32 %v116, %v225
  %v258 = vadd.f32 %v117, %v226
  %v259 = vadd.f32 %v118, %v227
  %v260 = vadd.f32 %v119, %v228
  %v261 = vadd.f32 %v120, %v229
  %v262 = vadd.f32 %v121, %v230
  %v263 = vadd.f32 %v122, %v231
  %v264 = vadd.f32 %v123, %v232
  %s265 = scalar_lea.vmem %s1, 64
  %v266 = vld [vmem:[%s265] sm:$0xff]
  %v267 = vld [vmem:[%s265 + $0x8] sm:$0xff]
  %v268 = vld [vmem:[%s265 + $0x10] sm:$0xff]
  %v269 = vld [vmem:[%s265 + $0x18] sm:$0xff]
  %s270 = scalar_lea.vmem %s0, 2
  %v271 = vld [vmem:[%s270] ss:$4 sm:$0x3]
  %s272 = scalar_lea.vmem %s0, 10
  %v273 = vld [vmem:[%s272] ss:$4 sm:$0x3]
  %s274 = scalar_lea.vmem %s0, 18
  %v275 = vld [vmem:[%s274] ss:$4 sm:$0x3]
  %s276 = scalar_lea.vmem %s0, 26
  %v277 = vld [vmem:[%s276] ss:$4 sm:$0x3]
  %279 = vset.pattern.permute.xlu0 0
  %280 = vperm.xlu0 %279, %v266
  %v281 = vpop.permute.xlu0 %280
  %284 = vset.pattern.permute.xlu0 0
  %285 = vperm.xlu0 %284, %v267
  %v286 = vpop.permute.xlu0 %285
  %289 = vset.pattern.permute.xlu0 0
  %290 = vperm.xlu0 %289, %v268
  %v291 = vpop.permute.xlu0 %290
  %294 = vset.pattern.permute.xlu0 0
  %295 = vperm.xlu0 %294, %v269
  %v296 = vpop.permute.xlu0 %295
  %v302 = vlaneseq
  %v303 = vshrl.u32 %v302, 7
  %v304 = vsub.s32 0, %v303
  %v305 = vrot.slane %v271, %v304
  %v306 = vlaneseq
  %v307 = vshrl.u32 %v306, 7
  %v308 = vsub.s32 1, %v307
  %v309 = vrot.slane %v271, %v308
  %v310 = vlaneseq
  %v311 = vshrl.u32 %v310, 7
  %v312 = vsub.s32 0, %v311
  %v313 = vrot.slane %v273, %v312
  %v314 = vlaneseq
  %v315 = vshrl.u32 %v314, 7
  %v316 = vsub.s32 1, %v315
  %v317 = vrot.slane %v273, %v316
  %v318 = vlaneseq
  %v319 = vshrl.u32 %v318, 7
  %v320 = vsub.s32 0, %v319
  %v321 = vrot.slane %v275, %v320
  %v322 = vlaneseq
  %v323 = vshrl.u32 %v322, 7
  %v324 = vsub.s32 1, %v323
  %v325 = vrot.slane %v275, %v324
  %v326 = vlaneseq
  %v327 = vshrl.u32 %v326, 7
  %v328 = vsub.s32 0, %v327
  %v329 = vrot.slane %v277, %v328
  %v330 = vlaneseq
  %v331 = vshrl.u32 %v330, 7
  %v332 = vsub.s32 1, %v331
  %v333 = vrot.slane %v277, %v332
  %v342 = vmul.f32 %v281, %v305
  %v343 = vmul.f32 %v281, %v309
  %v344 = vmul.f32 %v286, %v305
  %v345 = vmul.f32 %v286, %v309
  %v346 = vmul.f32 %v291, %v305
  %v347 = vmul.f32 %v291, %v309
  %v348 = vmul.f32 %v296, %v305
  %v349 = vmul.f32 %v296, %v309
  %v350 = vmul.f32 %v281, %v313
  %v351 = vmul.f32 %v281, %v317
  %v352 = vmul.f32 %v286, %v313
  %v353 = vmul.f32 %v286, %v317
  %v354 = vmul.f32 %v291, %v313
  %v355 = vmul.f32 %v291, %v317
  %v356 = vmul.f32 %v296, %v313
  %v357 = vmul.f32 %v296, %v317
  %v358 = vmul.f32 %v281, %v321
  %v359 = vmul.f32 %v281, %v325
  %v360 = vmul.f32 %v286, %v321
  %v361 = vmul.f32 %v286, %v325
  %v362 = vmul.f32 %v291, %v321
  %v363 = vmul.f32 %v291, %v325
  %v364 = vmul.f32 %v296, %v321
  %v365 = vmul.f32 %v296, %v325
  %v366 = vmul.f32 %v281, %v329
  %v367 = vmul.f32 %v281, %v333
  %v368 = vmul.f32 %v286, %v329
  %v369 = vmul.f32 %v286, %v333
  %v370 = vmul.f32 %v291, %v329
  %v371 = vmul.f32 %v291, %v333
  %v372 = vmul.f32 %v296, %v329
  %v373 = vmul.f32 %v296, %v333
  %v374 = vadd.f32 %v233, %v342
  %v375 = vadd.f32 %v234, %v343
  %v376 = vadd.f32 %v235, %v344
  %v377 = vadd.f32 %v236, %v345
  %v378 = vadd.f32 %v237, %v346
  %v379 = vadd.f32 %v238, %v347
  %v380 = vadd.f32 %v239, %v348
  %v381 = vadd.f32 %v240, %v349
  %v382 = vadd.f32 %v241, %v350
  %v383 = vadd.f32 %v242, %v351
  %v384 = vadd.f32 %v243, %v352
  %v385 = vadd.f32 %v244, %v353
  %v386 = vadd.f32 %v245, %v354
  %v387 = vadd.f32 %v246, %v355
  %v388 = vadd.f32 %v247, %v356
  %v389 = vadd.f32 %v248, %v357
  %v390 = vadd.f32 %v249, %v358
  %v391 = vadd.f32 %v250, %v359
  %v392 = vadd.f32 %v251, %v360
  %v393 = vadd.f32 %v252, %v361
  %v394 = vadd.f32 %v253, %v362
  %v395 = vadd.f32 %v254, %v363
  %v396 = vadd.f32 %v255, %v364
  %v397 = vadd.f32 %v256, %v365
  %v398 = vadd.f32 %v257, %v366
  %v399 = vadd.f32 %v258, %v367
  %v400 = vadd.f32 %v259, %v368
  %v401 = vadd.f32 %v260, %v369
  %v402 = vadd.f32 %v261, %v370
  %v403 = vadd.f32 %v262, %v371
  %v404 = vadd.f32 %v263, %v372
  %v405 = vadd.f32 %v264, %v373
  %s406 = scalar_lea.vmem %s1, 96
  %v407 = vld [vmem:[%s406] sm:$0xff]
  %v408 = vld [vmem:[%s406 + $0x8] sm:$0xff]
  %v409 = vld [vmem:[%s406 + $0x10] sm:$0xff]
  %v410 = vld [vmem:[%s406 + $0x18] sm:$0xff]
  %s411 = scalar_lea.vmem %s0, 3
  %v412 = vld [vmem:[%s411] ss:$4 sm:$0x3]
  %s413 = scalar_lea.vmem %s0, 11
  %v414 = vld [vmem:[%s413] ss:$4 sm:$0x3]
  %s415 = scalar_lea.vmem %s0, 19
  %v416 = vld [vmem:[%s415] ss:$4 sm:$0x3]
  %s417 = scalar_lea.vmem %s0, 27
  %v418 = vld [vmem:[%s417] ss:$4 sm:$0x3]
  %420 = vset.pattern.permute.xlu0 0
  %421 = vperm.xlu0 %420, %v407
  %v422 = vpop.permute.xlu0 %421
  %425 = vset.pattern.permute.xlu0 0
  %426 = vperm.xlu0 %425, %v408
  %v427 = vpop.permute.xlu0 %426
  %430 = vset.pattern.permute.xlu0 0
  %431 = vperm.xlu0 %430, %v409
  %v432 = vpop.permute.xlu0 %431
  %435 = vset.pattern.permute.xlu0 0
  %436 = vperm.xlu0 %435, %v410
  %v437 = vpop.permute.xlu0 %436
  %v443 = vlaneseq
  %v444 = vshrl.u32 %v443, 7
  %v445 = vsub.s32 0, %v444
  %v446 = vrot.slane %v412, %v445
  %v447 = vlaneseq
  %v448 = vshrl.u32 %v447, 7
  %v449 = vsub.s32 1, %v448
  %v450 = vrot.slane %v412, %v449
  %v451 = vlaneseq
  %v452 = vshrl.u32 %v451, 7
  %v453 = vsub.s32 0, %v452
  %v454 = vrot.slane %v414, %v453
  %v455 = vlaneseq
  %v456 = vshrl.u32 %v455, 7
  %v457 = vsub.s32 1, %v456
  %v458 = vrot.slane %v414, %v457
  %v459 = vlaneseq
  %v460 = vshrl.u32 %v459, 7
  %v461 = vsub.s32 0, %v460
  %v462 = vrot.slane %v416, %v461
  %v463 = vlaneseq
  %v464 = vshrl.u32 %v463, 7
  %v465 = vsub.s32 1, %v464
  %v466 = vrot.slane %v416, %v465
  %v467 = vlaneseq
  %v468 = vshrl.u32 %v467, 7
  %v469 = vsub.s32 0, %v468
  %v470 = vrot.slane %v418, %v469
  %v471 = vlaneseq
  %v472 = vshrl.u32 %v471, 7
  %v473 = vsub.s32 1, %v472
  %v474 = vrot.slane %v418, %v473
  %v483 = vmul.f32 %v422, %v446
  %v484 = vmul.f32 %v422, %v450
  %v485 = vmul.f32 %v427, %v446
  %v486 = vmul.f32 %v427, %v450
  %v487 = vmul.f32 %v432, %v446
  %v488 = vmul.f32 %v432, %v450
  %v489 = vmul.f32 %v437, %v446
  %v490 = vmul.f32 %v437, %v450
  %v491 = vmul.f32 %v422, %v454
  %v492 = vmul.f32 %v422, %v458
  %v493 = vmul.f32 %v427, %v454
  %v494 = vmul.f32 %v427, %v458
  %v495 = vmul.f32 %v432, %v454
  %v496 = vmul.f32 %v432, %v458
  %v497 = vmul.f32 %v437, %v454
  %v498 = vmul.f32 %v437, %v458
  %v499 = vmul.f32 %v422, %v462
  %v500 = vmul.f32 %v422, %v466
  %v501 = vmul.f32 %v427, %v462
  %v502 = vmul.f32 %v427, %v466
  %v503 = vmul.f32 %v432, %v462
  %v504 = vmul.f32 %v432, %v466
  %v505 = vmul.f32 %v437, %v462
  %v506 = vmul.f32 %v437, %v466
  %v507 = vmul.f32 %v422, %v470
  %v508 = vmul.f32 %v422, %v474
  %v509 = vmul.f32 %v427, %v470
  %v510 = vmul.f32 %v427, %v474
  %v511 = vmul.f32 %v432, %v470
  %v512 = vmul.f32 %v432, %v474
  %v513 = vmul.f32 %v437, %v470
  %v514 = vmul.f32 %v437, %v474
  %v515 = vadd.f32 %v374, %v483
  %v516 = vadd.f32 %v375, %v484
  %v517 = vadd.f32 %v376, %v485
  %v518 = vadd.f32 %v377, %v486
  %v519 = vadd.f32 %v378, %v487
  %v520 = vadd.f32 %v379, %v488
  %v521 = vadd.f32 %v380, %v489
  %v522 = vadd.f32 %v381, %v490
  %v523 = vadd.f32 %v382, %v491
  %v524 = vadd.f32 %v383, %v492
  %v525 = vadd.f32 %v384, %v493
  %v526 = vadd.f32 %v385, %v494
  %v527 = vadd.f32 %v386, %v495
  %v528 = vadd.f32 %v387, %v496
  %v529 = vadd.f32 %v388, %v497
  %v530 = vadd.f32 %v389, %v498
  %v531 = vadd.f32 %v390, %v499
  %v532 = vadd.f32 %v391, %v500
  %v533 = vadd.f32 %v392, %v501
  %v534 = vadd.f32 %v393, %v502
  %v535 = vadd.f32 %v394, %v503
  %v536 = vadd.f32 %v395, %v504
  %v537 = vadd.f32 %v396, %v505
  %v538 = vadd.f32 %v397, %v506
  %v539 = vadd.f32 %v398, %v507
  %v540 = vadd.f32 %v399, %v508
  %v541 = vadd.f32 %v400, %v509
  %v542 = vadd.f32 %v401, %v510
  %v543 = vadd.f32 %v402, %v511
  %v544 = vadd.f32 %v403, %v512
  %v545 = vadd.f32 %v404, %v513
  %v546 = vadd.f32 %v405, %v514
  %v547 = vmax.f32 %v515, 0.0
  %v548 = vmax.f32 %v516, 0.0
  %v549 = vmax.f32 %v517, 0.0
  %v550 = vmax.f32 %v518, 0.0
  %v551 = vmax.f32 %v519, 0.0
  %v552 = vmax.f32 %v520, 0.0
  %v553 = vmax.f32 %v521, 0.0
  %v554 = vmax.f32 %v522, 0.0
  %v555 = vmax.f32 %v523, 0.0
  %v556 = vmax.f32 %v524, 0.0
  %v557 = vmax.f32 %v525, 0.0
  %v558 = vmax.f32 %v526, 0.0
  %v559 = vmax.f32 %v527, 0.0
  %v560 = vmax.f32 %v528, 0.0
  %v561 = vmax.f32 %v529, 0.0
  %v562 = vmax.f32 %v530, 0.0
  %v563 = vmax.f32 %v531, 0.0
  %v564 = vmax.f32 %v532, 0.0
  %v565 = vmax.f32 %v533, 0.0
  %v566 = vmax.f32 %v534, 0.0
  %v567 = vmax.f32 %v535, 0.0
  %v568 = vmax.f32 %v536, 0.0
  %v569 = vmax.f32 %v537, 0.0
  %v570 = vmax.f32 %v538, 0.0
  %v571 = vmax.f32 %v539, 0.0
  %v572 = vmax.f32 %v540, 0.0
  %v573 = vmax.f32 %v541, 0.0
  %v574 = vmax.f32 %v542, 0.0
  %v575 = vmax.f32 %v543, 0.0
  %v576 = vmax.f32 %v544, 0.0
  %v577 = vmax.f32 %v545, 0.0
  %v578 = vmax.f32 %v546, 0.0
  %v579 = vadd.f32 %v547, %v548
  %580 = vadd.xlane.f32.xlu0 %v579
  %v581 = vpop.xlane.xlu0 %580
  %v582 = vadd.f32 %v549, %v550
  %583 = vadd.xlane.f32.xlu0 %v582
  %v584 = vpop.xlane.xlu0 %583
  %v585 = vadd.f32 %v551, %v552
  %586 = vadd.xlane.f32.xlu0 %v585
  %v587 = vpop.xlane.xlu0 %586
  %v588 = vadd.f32 %v553, %v554
  %589 = vadd.xlane.f32.xlu0 %v588
  %v590 = vpop.xlane.xlu0 %589
  %v591 = vadd.f32 %v555, %v556
  %592 = vadd.xlane.f32.xlu0 %v591
  %v593 = vpop.xlane.xlu0 %592
  %v594 = vadd.f32 %v557, %v558
  %595 = vadd.xlane.f32.xlu0 %v594
  %v596 = vpop.xlane.xlu0 %595
  %v597 = vadd.f32 %v559, %v560
  %598 = vadd.xlane.f32.xlu0 %v597
  %v599 = vpop.xlane.xlu0 %598
  %v600 = vadd.f32 %v561, %v562
  %601 = vadd.xlane.f32.xlu0 %v600
  %v602 = vpop.xlane.xlu0 %601
  %v603 = vadd.f32 %v563, %v564
  %604 = vadd.xlane.f32.xlu0 %v603
  %v605 = vpop.xlane.xlu0 %604
  %v606 = vadd.f32 %v565, %v566
  %607 = vadd.xlane.f32.xlu0 %v606
  %v608 = vpop.xlane.xlu0 %607
  %v609 = vadd.f32 %v567, %v568
  %610 = vadd.xlane.f32.xlu0 %v609
  %v611 = vpop.xlane.xlu0 %610
  %v612 = vadd.f32 %v569, %v570
  %613 = vadd.xlane.f32.xlu0 %v612
  %v614 = vpop.xlane.xlu0 %613
  %v615 = vadd.f32 %v571, %v572
  %616 = vadd.xlane.f32.xlu0 %v615
  %v617 = vpop.xlane.xlu0 %616
  %v618 = vadd.f32 %v573, %v574
  %619 = vadd.xlane.f32.xlu0 %v618
  %v620 = vpop.xlane.xlu0 %619
  %v621 = vadd.f32 %v575, %v576
  %622 = vadd.xlane.f32.xlu0 %v621
  %v623 = vpop.xlane.xlu0 %622
  %v624 = vadd.f32 %v577, %v578
  %625 = vadd.xlane.f32.xlu0 %v624
  %v626 = vpop.xlane.xlu0 %625
  %v627 = vld [vmem:[%s2] sm:$0xff]
  %v628 = vld [vmem:[%s2 + $0x8] sm:$0xff]
  %v629 = vld [vmem:[%s2 + $0x10] sm:$0xff]
  %v630 = vld [vmem:[%s2 + $0x18] sm:$0xff]
  %v647 = vlaneseq
  %v648 = vand.u32 %v647, 127
  %v649 = vlaneseq
  %v650 = vshrl.u32 %v649, 7
  %v651 = vsub.s32 %v648, %v650
  %v652 = vrot.slane %v581, %v651
  %v653 = vadd.s32 %v648, 4294967288
  %v654 = vlaneseq
  %v655 = vshrl.u32 %v654, 7
  %v656 = vsub.s32 %v653, %v655
  %v657 = vrot.slane %v584, %v656
  %vm658 = vcmask 130112
  %v659 = vsel %vm658, %v657, %v652
  %v660 = vadd.s32 %v648, 4294967280
  %v661 = vlaneseq
  %v662 = vshrl.u32 %v661, 7
  %v663 = vsub.s32 %v660, %v662
  %v664 = vrot.slane %v587, %v663
  %vm665 = vcmask 195712
  %v666 = vsel %vm665, %v664, %v659
  %v667 = vadd.s32 %v648, 4294967272
  %v668 = vlaneseq
  %v669 = vshrl.u32 %v668, 7
  %v670 = vsub.s32 %v667, %v669
  %v671 = vrot.slane %v590, %v670
  %vm672 = vcmask 261312
  %v673 = vsel %vm672, %v671, %v666
  %v674 = vlaneseq
  %v675 = vshrl.u32 %v674, 7
  %v676 = vsub.s32 %v648, %v675
  %v677 = vrot.slane %v593, %v676
  %v678 = vlaneseq
  %v679 = vshrl.u32 %v678, 7
  %v680 = vsub.s32 %v653, %v679
  %v681 = vrot.slane %v596, %v680
  %v682 = vsel %vm658, %v681, %v677
  %v683 = vlaneseq
  %v684 = vshrl.u32 %v683, 7
  %v685 = vsub.s32 %v660, %v684
  %v686 = vrot.slane %v599, %v685
  %v687 = vsel %vm665, %v686, %v682
  %v688 = vlaneseq
  %v689 = vshrl.u32 %v688, 7
  %v690 = vsub.s32 %v667, %v689
  %v691 = vrot.slane %v602, %v690
  %v692 = vsel %vm672, %v691, %v687
  %v693 = vlaneseq
  %v694 = vshrl.u32 %v693, 7
  %v695 = vsub.s32 %v648, %v694
  %v696 = vrot.slane %v605, %v695
  %v697 = vlaneseq
  %v698 = vshrl.u32 %v697, 7
  %v699 = vsub.s32 %v653, %v698
  %v700 = vrot.slane %v608, %v699
  %v701 = vsel %vm658, %v700, %v696
  %v702 = vlaneseq
  %v703 = vshrl.u32 %v702, 7
  %v704 = vsub.s32 %v660, %v703
  %v705 = vrot.slane %v611, %v704
  %v706 = vsel %vm665, %v705, %v701
  %v707 = vlaneseq
  %v708 = vshrl.u32 %v707, 7
  %v709 = vsub.s32 %v667, %v708
  %v710 = vrot.slane %v614, %v709
  %v711 = vsel %vm672, %v710, %v706
  %v712 = vlaneseq
  %v713 = vshrl.u32 %v712, 7
  %v714 = vsub.s32 %v648, %v713
  %v715 = vrot.slane %v617, %v714
  %v716 = vlaneseq
  %v717 = vshrl.u32 %v716, 7
  %v718 = vsub.s32 %v653, %v717
  %v719 = vrot.slane %v620, %v718
  %v720 = vsel %vm658, %v719, %v715
  %v721 = vlaneseq
  %v722 = vshrl.u32 %v721, 7
  %v723 = vsub.s32 %v660, %v722
  %v724 = vrot.slane %v623, %v723
  %v725 = vsel %vm665, %v724, %v720
  %v726 = vlaneseq
  %v727 = vshrl.u32 %v726, 7
  %v728 = vsub.s32 %v667, %v727
  %v729 = vrot.slane %v626, %v728
  %v730 = vsel %vm672, %v729, %v725
  %vm731 = vcmask 1041409
  %v732 = vsel %vm731, %v692, %v673
  %vm733 = vcmask 1042434
  %v734 = vsel %vm733, %v711, %v732
  %vm735 = vcmask 1043459
  %v736 = vsel %vm735, %v730, %v734
  %vm737 = vcmask 261120
  %v738 = vsel %vm737, %v736, 0
  %740 = vmatprep.subr.mxu0 0.0
  %741 = vmatpush1.msra.mxu0 %v627
  %742 = vmatprep.subr.mxu0 0.0
  %743 = vmatpush1.msra.mxu0 %v628
  %744 = vmatprep.subr.mxu0 0.0
  %745 = vmatpush1.msra.mxu0 %v629
  %746 = vmatprep.subr.mxu0 0.0
  %747 = vmatpush1.msra.mxu0 %v630
  %748 = vmatprep.subr.mxu0 0.0
  %749 = vmatpush1.msra.mxu0 0.0
  %750 = vmatprep.subr.mxu0 0.0
  %751 = vmatpush1.msra.mxu0 0.0
  %752 = vmatprep.subr.mxu0 0.0
  %753 = vmatpush1.msra.mxu0 0.0
  %754 = vmatprep.subr.mxu0 0.0
  %755 = vmatpush1.msra.mxu0 0.0
  %756 = vmatprep.subr.mxu0 0.0
  %757 = vmatpush1.msra.mxu0 0.0
  %758 = vmatprep.subr.mxu0 0.0
  %759 = vmatpush1.msra.mxu0 0.0
  %760 = vmatprep.subr.mxu0 0.0
  %761 = vmatpush1.msra.mxu0 0.0
  %762 = vmatprep.subr.mxu0 0.0
  %763 = vmatpush1.msra.mxu0 0.0
  %764 = vmatprep.subr.mxu0 0.0
  %765 = vmatpush1.msra.mxu0 0.0
  %766 = vmatprep.subr.mxu0 0.0
  %767 = vmatpush1.msra.mxu0 0.0
  %768 = vmatprep.subr.mxu0 0.0
  %769 = vmatpush1.msra.mxu0 0.0
  %770 = vmatprep.subr.mxu0 0.0
  %771 = vmatpush1.msra.mxu0 0.0
  %772 = vmatprep.subr.mxu0 0.0
  %773 = vmatpush1.msra.mxu0 0.0
  %774 = vmatprep.subr.mxu0 0.0
  %775 = vmatpush1.msra.mxu0 0.0
  %776 = vmatprep.subr.mxu0 0.0
  %777 = vmatpush1.msra.mxu0 0.0
  %778 = vmatprep.subr.mxu0 0.0
  %779 = vmatpush1.msra.mxu0 0.0
  %780 = vmatprep.subr.mxu0 0.0
  %781 = vmatpush1.msra.mxu0 0.0
  %782 = vmatprep.subr.mxu0 0.0
  %783 = vmatpush1.msra.mxu0 0.0
  %784 = vmatprep.subr.mxu0 0.0
  %785 = vmatpush1.msra.mxu0 0.0
  %786 = vmatprep.subr.mxu0 0.0
  %787 = vmatpush1.msra.mxu0 0.0
  %788 = vmatprep.subr.mxu0 0.0
  %789 = vmatpush1.msra.mxu0 0.0
  %790 = vmatprep.subr.mxu0 0.0
  %791 = vmatpush1.msra.mxu0 0.0
  %792 = vmatprep.subr.mxu0 0.0
  %793 = vmatpush1.msra.mxu0 0.0
  %794 = vmatprep.subr.mxu0 0.0
  %795 = vmatpush1.msra.mxu0 0.0
  %796 = vmatprep.subr.mxu0 0.0
  %797 = vmatpush1.msra.mxu0 0.0
  %798 = vmatprep.subr.mxu0 0.0
  %799 = vmatpush1.msra.mxu0 0.0
  %800 = vmatprep.subr.mxu0 0.0
  %801 = vmatpush1.msra.mxu0 0.0
  %802 = vmatprep.subr.mxu0 0.0
  %803 = vmatpush1.msra.mxu0 0.0
  %804 = vmatprep.mubr.f32.mxu0 0.0
  %805 = vmatmul.mubr.f32.gmra.mrb[0].mxu0 %v738
  %v806 = vpop.f32.mrb[0].mxu0
  %v807 = vadd.f32 0.0, %v806
  %v808 = vpop.f32.mrb[0].mxu0
  %809 = vdwg.mxu0
  %v810 = vmax.f32 %v807, 0.0
  %v811 = vld [vmem:[%s3] sm:$0xff]
  %v812 = vld [vmem:[%s3 + $0x8] sm:$0xff]
  %v813 = vld [vmem:[%s3 + $0x10] sm:$0xff]
  %v814 = vld [vmem:[%s3 + $0x18] sm:$0xff]
  %v816 = vsel %vm737, %v810, 0
  %818 = vmatprep.subr.mxu0 0.0
  %819 = vmatpush1.msra.mxu0 %v811
  %820 = vmatprep.subr.mxu0 0.0
  %821 = vmatpush1.msra.mxu0 %v812
  %822 = vmatprep.subr.mxu0 0.0
  %823 = vmatpush1.msra.mxu0 %v813
  %824 = vmatprep.subr.mxu0 0.0
  %825 = vmatpush1.msra.mxu0 %v814
  %826 = vmatprep.subr.mxu0 0.0
  %827 = vmatpush1.msra.mxu0 0.0
  %828 = vmatprep.subr.mxu0 0.0
  %829 = vmatpush1.msra.mxu0 0.0
  %830 = vmatprep.subr.mxu0 0.0
  %831 = vmatpush1.msra.mxu0 0.0
  %832 = vmatprep.subr.mxu0 0.0
  %833 = vmatpush1.msra.mxu0 0.0
  %834 = vmatprep.subr.mxu0 0.0
  %835 = vmatpush1.msra.mxu0 0.0
  %836 = vmatprep.subr.mxu0 0.0
  %837 = vmatpush1.msra.mxu0 0.0
  %838 = vmatprep.subr.mxu0 0.0
  %839 = vmatpush1.msra.mxu0 0.0
  %840 = vmatprep.subr.mxu0 0.0
  %841 = vmatpush1.msra.mxu0 0.0
  %842 = vmatprep.subr.mxu0 0.0
  %843 = vmatpush1.msra.mxu0 0.0
  %844 = vmatprep.subr.mxu0 0.0
  %845 = vmatpush1.msra.mxu0 0.0
  %846 = vmatprep.subr.mxu0 0.0
  %847 = vmatpush1.msra.mxu0 0.0
  %848 = vmatprep.subr.mxu0 0.0
  %849 = vmatpush1.msra.mxu0 0.0
  %850 = vmatprep.subr.mxu0 0.0
  %851 = vmatpush1.msra.mxu0 0.0
  %852 = vmatprep.subr.mxu0 0.0
  %853 = vmatpush1.msra.mxu0 0.0
  %854 = vmatprep.subr.mxu0 0.0
  %855 = vmatpush1.msra.mxu0 0.0
  %856 = vmatprep.subr.mxu0 0.0
  %857 = vmatpush1.msra.mxu0 0.0
  %858 = vmatprep.subr.mxu0 0.0
  %859 = vmatpush1.msra.mxu0 0.0
  %860 = vmatprep.subr.mxu0 0.0
  %861 = vmatpush1.msra.mxu0 0.0
  %862 = vmatprep.subr.mxu0 0.0
  %863 = vmatpush1.msra.mxu0 0.0
  %864 = vmatprep.subr.mxu0 0.0
  %865 = vmatpush1.msra.mxu0 0.0
  %866 = vmatprep.subr.mxu0 0.0
  %867 = vmatpush1.msra.mxu0 0.0
  %868 = vmatprep.subr.mxu0 0.0
  %869 = vmatpush1.msra.mxu0 0.0
  %870 = vmatprep.subr.mxu0 0.0
  %871 = vmatpush1.msra.mxu0 0.0
  %872 = vmatprep.subr.mxu0 0.0
  %873 = vmatpush1.msra.mxu0 0.0
  %874 = vmatprep.subr.mxu0 0.0
  %875 = vmatpush1.msra.mxu0 0.0
  %876 = vmatprep.subr.mxu0 0.0
  %877 = vmatpush1.msra.mxu0 0.0
  %878 = vmatprep.subr.mxu0 0.0
  %879 = vmatpush1.msra.mxu0 0.0
  %880 = vmatprep.subr.mxu0 0.0
  %881 = vmatpush1.msra.mxu0 0.0
  %882 = vmatprep.mubr.f32.mxu0 0.0
  %883 = vmatmul.mubr.f32.gmra.mrb[0].mxu0 %v816
  %v884 = vpop.f32.mrb[0].mxu0
  %v885 = vadd.f32 0.0, %v884
  %v886 = vpop.f32.mrb[0].mxu0
  %887 = vdwg.mxu0
  %890 = vrot.lane.b32.xlu0 %v885, 32
  %v891 = vpop.permute.xlu0 %890
  %v893 = vsel %vm737, %v736, %v891
  %894 = vst [vmem:[%s4] sm:$0xf] %v893
  // Predicated region
  $region18: #{simclr_forward.1} parent=0 // pred_check
    _
  $region19: #{simclr_forward.1} parent=0 // pred_check_branch
    %896 = sbr.rel (0) target = $region21
  $region20: #{simclr_forward.1} parent=0 // pred_region
    _
  $region21: #{simclr_forward.1} parent=0 // pred_fallthru
    _
  // Predicated region
  $region22: #{simclr_forward.1} parent=0 // pred_check
    _
  $region23: #{simclr_forward.1} parent=0 // pred_check_branch
    %898 = sbr.rel (0) target = $region25
  $region24: #{simclr_forward.1} parent=0 // pred_region
    _
  $region25: #{simclr_forward.1} parent=0 // pred_fallthru
    _

</llo_original>
